<compile_context>
chip_gen: v6e
topology: v6e:2x2x1
jax: 0.10.0
libtpu: 0.0.40
codegen_flags: <defaults>
</compile_context>

<pallas_src>
import functools

import jax
import jax.numpy as jnp
from jax.experimental import pallas as pl
from jax.experimental.pallas import tpu as pltpu


def residual_block_kernel(x_ref, wpw_ref, w2_ref, cc_ref, o_ref, *,
                          kernel_size, dilation, c_in, c_res, add_residual):
    """One batch element per grid step.  x block: (1, C_in, T); out: (1, C_res, T_out)."""
    t_out = o_ref.shape[2]

    x = x_ref[0]                                       # (C_in, T), time on lanes
    if x_ref.dtype != jnp.float32:
        x = x.astype(jnp.float32)

    k_b1 = kernel_size          # packed column: folded depthwise bias (a1*b_dw + b1)
    k_b2 = kernel_size + 1      # packed column: folded pointwise bias (a2*b_pw + b2)
    k_b3 = kernel_size + 2      # packed column: folded conv2 bias     (a3*b2  + b3)

    # --- depthwise dilated conv (groups=C_in) with bn folded into the taps ---
    acc = x[:, 0:t_out] * cc_ref[0:c_in, 0:1] + cc_ref[0:c_in, k_b1:k_b1 + 1]
    for k in range(1, kernel_size):                    # static unroll, K is small
        off = k * dilation
        acc = acc + x[:, off:off + t_out] * cc_ref[0:c_in, k:k + 1]

    # --- pointwise 1x1 conv (bn1 folded) + relu1 : (C_res, C_in) @ (C_in, T_out) ---
    y = jnp.dot(wpw_ref[...], acc, preferred_element_type=jnp.float32)
    y = jnp.maximum(y + cc_ref[0:c_res, k_b2:k_b2 + 1], 0.0)

    # --- conv2 (1x1, bn2 folded) ---
    y = jnp.dot(w2_ref[...], y, preferred_element_type=jnp.float32)
    y = y + cc_ref[0:c_res, k_b3:k_b3 + 1]

    # --- residual add of inputs[:, :, rf:] (only when C_in == C_res) + relu2 ---
    if add_residual:
        rf = dilation * (kernel_size - 1)
        y = y + x[:, rf:rf + t_out]
    o_ref[0] = jnp.maximum(y, 0.0).astype(o_ref.dtype)


def residual_block(x_bct, params, *, kernel_size, dilation):
    """x_bct: (B, C_in, T), PyTorch NCW layout.  Returns (B, C_res, T - rf)."""
    B, C_in, T = x_bct.shape
    rf = dilation * (kernel_size - 1)
    t_out = T - rf
    C_res = params["w_pw"].shape[0]
    add_residual = (C_in == C_res)

    kernel = functools.partial(
        residual_block_kernel, kernel_size=kernel_size, dilation=dilation,
        c_in=C_in, c_res=C_res, add_residual=add_residual)

    cc_shape = params["cc"].shape

    grid_spec = pltpu.PrefetchScalarGridSpec(
        num_scalar_prefetch=0,
        grid=(B,),
        in_specs=[
            pl.BlockSpec((1, C_in, T), lambda b: (b, 0, 0)),      # activations (time on lanes)
            pl.BlockSpec((C_res, C_in), lambda b: (0, 0)),        # folded pointwise weight
            pl.BlockSpec((C_res, C_res), lambda b: (0, 0)),       # folded conv2 weight
            pl.BlockSpec(cc_shape, lambda b: (0, 0)),             # packed per-channel constants
        ],
        out_specs=pl.BlockSpec((1, C_res, t_out), lambda b: (b, 0, 0)),
    )

    return pl.pallas_call(
        kernel,
        out_shape=jax.ShapeDtypeStruct((B, C_res, t_out), x_bct.dtype),
        grid_spec=grid_spec,
        compiler_params=pltpu.CompilerParams(dimension_semantics=("parallel",)),
    )(x_bct, params["w_pw"], params["w2"], params["cc"])


def fold_params(w_dw_t, b_dw_t, bn_in, w_pw_t, b_pw_t, bn1, w2_t, b2_t, bn2, eps=1e-5):
    """Fold the three BatchNorm1d layers (inference mode) into the conv weights and
    pack all per-channel vectors into one (Cmax, K+3) array (channels on sublanes)."""
    def scale_shift(bn):
        gamma, beta, mean, var = bn
        a = gamma / jnp.sqrt(var + eps)
        return a, beta - mean * a

    a1, s1 = scale_shift(bn_in)                       # (C_in,)
    a2, s2 = scale_shift(bn1)                         # (C_res,)
    a3, s3 = scale_shift(bn2)                         # (C_res,)

    w_dw = w_dw_t[:, 0, :]                            # (C_in, K) depthwise taps
    c_in, K = w_dw.shape
    c_res = w_pw_t.shape[0]
    c_max = max(c_in, c_res)

    taps = w_dw * a1[:, None]                         # bn-in scale folded per tap
    b_dw_f = a1 * b_dw_t + s1                         # (C_in,)
    b_pw_f = a2 * b_pw_t + s2                         # (C_res,)
    b_2_f = a3 * b2_t + s3                            # (C_res,)

    cc = jnp.zeros((c_max, K + 3), jnp.float32)
    cc = cc.at[:c_in, :K].set(taps)
    cc = cc.at[:c_in, K].set(b_dw_f)
    cc = cc.at[:c_res, K + 1].set(b_pw_f)
    cc = cc.at[:c_res, K + 2].set(b_2_f)

    return {
        "w_pw": (w_pw_t[:, :, 0] * a2[:, None]).astype(jnp.float32),  # (C_res, C_in)
        "w2": (w2_t[:, :, 0] * a3[:, None]).astype(jnp.float32),      # (C_res, C_res)
        "cc": cc,                                                     # (Cmax, K+3)
    }


if __name__ == "__main__":
    B, C_in, C_res, T = 2, 8, 8, 32
    K, dilation = 3, 2
    eps = 1e-5

    key = jax.random.PRNGKey(0)
    ks = jax.random.split(key, 20)

    x = jax.random.normal(ks[0], (B, C_in, T), jnp.float32)

    # Parameters (PyTorch shapes), deterministic synthetic init.
    w_dw_t = 0.5 * jax.random.normal(ks[1], (C_in, 1, K), jnp.float32)     # conv1.conv.weight
    b_dw_t = 0.1 * jax.random.normal(ks[2], (C_in,), jnp.float32)          # conv1.conv.bias
    g1 = 1.0 + 0.1 * jax.random.normal(ks[3], (C_in,), jnp.float32)        # conv1.bn
    be1 = 0.1 * jax.random.normal(ks[4], (C_in,), jnp.float32)
    m1 = 0.05 * jax.random.normal(ks[5], (C_in,), jnp.float32)
    v1 = 1.0 + 0.1 * jnp.abs(jax.random.normal(ks[6], (C_in,), jnp.float32))
    w_pw_t = 0.3 * jax.random.normal(ks[7], (C_res, C_in, 1), jnp.float32) # conv1.pointwise.weight
    b_pw_t = 0.1 * jax.random.normal(ks[8], (C_res,), jnp.float32)
    g2 = 1.0 + 0.1 * jax.random.normal(ks[9], (C_res,), jnp.float32)       # bn1
    be2 = 0.1 * jax.random.normal(ks[10], (C_res,), jnp.float32)
    m2 = 0.05 * jax.random.normal(ks[11], (C_res,), jnp.float32)
    v2 = 1.0 + 0.1 * jnp.abs(jax.random.normal(ks[12], (C_res,), jnp.float32))
    w2_t = 0.3 * jax.random.normal(ks[13], (C_res, C_res, 1), jnp.float32) # conv2.weight
    b2_t = 0.1 * jax.random.normal(ks[14], (C_res,), jnp.float32)
    g3 = 1.0 + 0.1 * jax.random.normal(ks[15], (C_res,), jnp.float32)      # bn2
    be3 = 0.1 * jax.random.normal(ks[16], (C_res,), jnp.float32)
    m3 = 0.05 * jax.random.normal(ks[17], (C_res,), jnp.float32)
    v3 = 1.0 + 0.1 * jnp.abs(jax.random.normal(ks[18], (C_res,), jnp.float32))

    params = fold_params(
        w_dw_t, b_dw_t, (g1, be1, m1, v1),
        w_pw_t, b_pw_t, (g2, be2, m2, v2),
        w2_t, b2_t, (g3, be3, m3, v3), eps=eps)

    out = residual_block(x, params, kernel_size=K, dilation=dilation)
    jax.block_until_ready(out)

    # ---- plain-JAX reference (unfolded math, NCW layout, mirrors the torch module) ----
    rf = dilation * (K - 1)
    t_out = T - rf
    dw = jnp.zeros((B, C_in, t_out), jnp.float32)
    for k in range(K):
        dw = dw + x[:, :, k * dilation:k * dilation + t_out] * w_dw_t[:, 0, k][None, :, None]
    dw = dw + b_dw_t[None, :, None]
    dw = (dw - m1[None, :, None]) / jnp.sqrt(v1 + eps)[None, :, None] * g1[None, :, None] + be1[None, :, None]
    pw = jnp.einsum('oc,bct->bot', w_pw_t[:, :, 0], dw) + b_pw_t[None, :, None]
    h = (pw - m2[None, :, None]) / jnp.sqrt(v2 + eps)[None, :, None] * g2[None, :, None] + be2[None, :, None]
    h = jnp.maximum(h, 0.0)
    h = jnp.einsum('oc,bct->bot', w2_t[:, :, 0], h) + b2_t[None, :, None]
    h = (h - m3[None, :, None]) / jnp.sqrt(v3 + eps)[None, :, None] * g3[None, :, None] + be3[None, :, None]
    if C_in == C_res:
        h = h + x[:, :, rf:]
    ref = jnp.maximum(h, 0.0)

    assert out.shape == (B, C_res, t_out), out.shape
    assert jnp.allclose(out, ref, atol=1e-4, rtol=1e-4), float(jnp.max(jnp.abs(out - ref)))
    print("KERNEL_OK")
</pallas_src>

<mosaic_0001>
module attributes {stable_mosaic.version = 11 : i64} {
  func.func @residual_block_kernel(%arg0: i32, %arg1: memref<1x8x32xf32, #tpu.memory_space<vmem>>, %arg2: memref<8x8xf32, #tpu.memory_space<vmem>>, %arg3: memref<8x8xf32, #tpu.memory_space<vmem>>, %arg4: memref<8x6xf32, #tpu.memory_space<vmem>>, %arg5: memref<1x8x28xf32, #tpu.memory_space<vmem>>) attributes {dimension_semantics = [#tpu.dimension_semantics<parallel>], iteration_bounds = array<i64: 2>, scalar_prefetch = 0 : i64, scratch_operands = 0 : i64, tpu.core_type = #tpu.core_type<tc>, window_params = [{transform_indices = @transform_0, window_bounds = array<i64: 1, 8, 32>}, {pipeline_mode = #tpu.pipeline_mode<synchronous>, transform_indices = @transform_1, window_bounds = array<i64: 8, 8>}, {pipeline_mode = #tpu.pipeline_mode<synchronous>, transform_indices = @transform_2, window_bounds = array<i64: 8, 8>}, {pipeline_mode = #tpu.pipeline_mode<synchronous>, transform_indices = @transform_3, window_bounds = array<i64: 8, 6>}, {transform_indices = @transform_4, window_bounds = array<i64: 1, 8, 28>}]} {
    %c0 = arith.constant 0 : index
    %c0_0 = arith.constant 0 : index
    %c0_1 = arith.constant 0 : index
    %0 = vector.load %arg1[%c0, %c0_0, %c0_1] : memref<1x8x32xf32, #tpu.memory_space<vmem>>, vector<1x8x32xf32>
    %1 = vector.shape_cast %0 : vector<1x8x32xf32> to vector<8x32xf32>
    %2 = vector.extract_strided_slice %1 {offsets = [0, 0], sizes = [8, 28], strides = [1, 1]} : vector<8x32xf32> to vector<8x28xf32>
    %c0_2 = arith.constant 0 : index
    %c0_3 = arith.constant 0 : index
    %3 = vector.load %arg4[%c0_2, %c0_3] : memref<8x6xf32, #tpu.memory_space<vmem>>, vector<8x1xf32>
    %4 = vector.broadcast %3 : vector<8x1xf32> to vector<8x28xf32>
    %5 = arith.mulf %2, %4 : vector<8x28xf32>
    %c0_4 = arith.constant 0 : index
    %c3 = arith.constant 3 : index
    %6 = vector.load %arg4[%c0_4, %c3] : memref<8x6xf32, #tpu.memory_space<vmem>>, vector<8x1xf32>
    %7 = vector.broadcast %6 : vector<8x1xf32> to vector<8x28xf32>
    %8 = arith.addf %5, %7 : vector<8x28xf32>
    %9 = vector.extract_strided_slice %1 {offsets = [0, 2], sizes = [8, 28], strides = [1, 1]} : vector<8x32xf32> to vector<8x28xf32>
    %c0_5 = arith.constant 0 : index
    %c1 = arith.constant 1 : index
    %10 = vector.load %arg4[%c0_5, %c1] : memref<8x6xf32, #tpu.memory_space<vmem>>, vector<8x1xf32>
    %11 = vector.broadcast %10 : vector<8x1xf32> to vector<8x28xf32>
    %12 = arith.mulf %9, %11 : vector<8x28xf32>
    %13 = arith.addf %8, %12 : vector<8x28xf32>
    %14 = vector.extract_strided_slice %1 {offsets = [0, 4], sizes = [8, 28], strides = [1, 1]} : vector<8x32xf32> to vector<8x28xf32>
    %c0_6 = arith.constant 0 : index
    %c2 = arith.constant 2 : index
    %15 = vector.load %arg4[%c0_6, %c2] : memref<8x6xf32, #tpu.memory_space<vmem>>, vector<8x1xf32>
    %16 = vector.broadcast %15 : vector<8x1xf32> to vector<8x28xf32>
    %17 = arith.mulf %14, %16 : vector<8x28xf32>
    %18 = arith.addf %13, %17 : vector<8x28xf32>
    %c0_7 = arith.constant 0 : index
    %c0_8 = arith.constant 0 : index
    %19 = vector.load %arg2[%c0_7, %c0_8] : memref<8x8xf32, #tpu.memory_space<vmem>>, vector<8x8xf32>
    %cst = arith.constant dense<0.000000e+00> : vector<8x28xf32>
    %20 = tpu.matmul %19, %18, %cst {dimension_numbers = #tpu.dot_dimension_numbers<[1], [0], [0], [1], [0, 0, 1, 1], [], []>} : vector<8x8xf32>, vector<8x28xf32>, vector<8x28xf32> -> vector<8x28xf32>
    %c0_9 = arith.constant 0 : index
    %c4 = arith.constant 4 : index
    %21 = vector.load %arg4[%c0_9, %c4] : memref<8x6xf32, #tpu.memory_space<vmem>>, vector<8x1xf32>
    %22 = vector.broadcast %21 : vector<8x1xf32> to vector<8x28xf32>
    %23 = arith.addf %20, %22 : vector<8x28xf32>
    %cst_10 = arith.constant 0.000000e+00 : f32
    %24 = vector.broadcast %cst_10 : f32 to vector<8x28xf32>
    %25 = arith.maximumf %23, %24 : vector<8x28xf32>
    %c0_11 = arith.constant 0 : index
    %c0_12 = arith.constant 0 : index
    %26 = vector.load %arg3[%c0_11, %c0_12] : memref<8x8xf32, #tpu.memory_space<vmem>>, vector<8x8xf32>
    %cst_13 = arith.constant dense<0.000000e+00> : vector<8x28xf32>
    %27 = tpu.matmul %26, %25, %cst_13 {dimension_numbers = #tpu.dot_dimension_numbers<[1], [0], [0], [1], [0, 0, 1, 1], [], []>} : vector<8x8xf32>, vector<8x28xf32>, vector<8x28xf32> -> vector<8x28xf32>
    %c0_14 = arith.constant 0 : index
    %c5 = arith.constant 5 : index
    %28 = vector.load %arg4[%c0_14, %c5] : memref<8x6xf32, #tpu.memory_space<vmem>>, vector<8x1xf32>
    %29 = vector.broadcast %28 : vector<8x1xf32> to vector<8x28xf32>
    %30 = arith.addf %27, %29 : vector<8x28xf32>
    %31 = vector.extract_strided_slice %1 {offsets = [0, 4], sizes = [8, 28], strides = [1, 1]} : vector<8x32xf32> to vector<8x28xf32>
    %32 = arith.addf %30, %31 : vector<8x28xf32>
    %cst_15 = arith.constant 0.000000e+00 : f32
    %33 = vector.broadcast %cst_15 : f32 to vector<8x28xf32>
    %34 = arith.maximumf %32, %33 : vector<8x28xf32>
    %c0_16 = arith.constant 0 : index
    %c0_17 = arith.constant 0 : index
    %c0_18 = arith.constant 0 : index
    %35 = vector.load %arg5[%c0_16, %c0_17, %c0_18] : memref<1x8x28xf32, #tpu.memory_space<vmem>>, vector<1x8x28xf32>
    %36 = vector.shape_cast %35 : vector<1x8x28xf32> to vector<8x28xf32>
    %37 = vector.shape_cast %34 : vector<8x28xf32> to vector<1x8x28xf32>
    tpu.vector_store %arg5[%c0_16, %c0_17, %c0_18], %37 {strides = array<i32>} : memref<1x8x28xf32, #tpu.memory_space<vmem>>, vector<1x8x28xf32>,
    return
  }
  func.func @transform_0(%arg0: i32) -> (i32, i32, i32) {
    %c0_i32 = arith.constant 0 : i32
    %c0_i32_0 = arith.constant 0 : i32
    %c0_i32_1 = arith.constant 0 : i32
    return %arg0, %c0_i32, %c0_i32_0 : i32, i32, i32
  }
  func.func @transform_1(%arg0: i32) -> (i32, i32) {
    %c0_i32 = arith.constant 0 : i32
    %c0_i32_0 = arith.constant 0 : i32
    %c0_i32_1 = arith.constant 0 : i32
    return %c0_i32, %c0_i32_0 : i32, i32
  }
  func.func @transform_2(%arg0: i32) -> (i32, i32) {
    %c0_i32 = arith.constant 0 : i32
    %c0_i32_0 = arith.constant 0 : i32
    %c0_i32_1 = arith.constant 0 : i32
    return %c0_i32, %c0_i32_0 : i32, i32
  }
  func.func @transform_3(%arg0: i32) -> (i32, i32) {
    %c0_i32 = arith.constant 0 : i32
    %c0_i32_0 = arith.constant 0 : i32
    %c0_i32_1 = arith.constant 0 : i32
    return %c0_i32, %c0_i32_0 : i32, i32
  }
  func.func @transform_4(%arg0: i32) -> (i32, i32, i32) {
    %c0_i32 = arith.constant 0 : i32
    %c0_i32_0 = arith.constant 0 : i32
    %c0_i32_1 = arith.constant 0 : i32
    return %arg0, %c0_i32, %c0_i32_0 : i32, i32, i32
  }
}

</mosaic_0001>

<llo_original>
// kernel: tpu_custom_call.1
$region0: #{tpu_custom_call.1}
  #allocation0 [shape = 'u32[]', space=smem, size = 0x4, offset = 0x4, fixed_abs, tag = 'smem constant byte address 0x4 - core index']
  #allocation1 [shape = 'u32[144,128]{1,0:T(1,128)}', space=vmem, size = 0x12000, scoped, tag = 'internal scratch']
  %s0 = inlined_call_operand.hbm [shape: f32[2,8,32], index: 0, kind: input, shape index: {}]
  %s1 = inlined_call_operand.hbm [shape: f32[8,8], index: 1, kind: input, shape index: {}]
  %s2 = inlined_call_operand.hbm [shape: f32[8,8], index: 2, kind: input, shape index: {}]
  %s3 = inlined_call_operand.hbm [shape: f32[8,6], index: 3, kind: input, shape index: {}]
  %s4 = inlined_call_operand.hbm [shape: f32[2,8,28], index: 4, kind: output, shape index: {}]
  %s5 = sld [smem:[#allocation0]]
  $region65: #{tpu_custom_call.1} parent=0
    _
  %s7 = ssub.s32 1, %s5
  %s8 = scalar_select 0, %s7, %s5
  $region1: #{tpu_custom_call.1} parent=0
    #allocation2 [shape = 'u8[8192]{0}', space=vmem, size = 0x2000, scoped, tag = 'input window, operand 0']
    #allocation3 [shape = 's32[2]{0}', space=sflag, size = 0x8, scoped, tag = 'scoped memory for tpu_custom_call.1']
    #allocation4 [shape = 's32[2]{0}', space=sflag, size = 0x8, scoped, tag = 'scoped memory for tpu_custom_call.1']
    #allocation5 [shape = 'u8[4096]{0}', space=vmem, size = 0x1000, scoped, tag = 'input window, operand 1, single buffered']
    #allocation6 [shape = 's32[1]{0}', space=sflag, size = 0x4, scoped, tag = 'scoped memory for tpu_custom_call.1']
    #allocation7 [shape = 'u8[4096]{0}', space=vmem, size = 0x1000, scoped, tag = 'input window, operand 2, single buffered']
    #allocation8 [shape = 'u8[4096]{0}', space=vmem, size = 0x1000, scoped, tag = 'input window, operand 3, single buffered']
    #allocation9 [shape = 's32[1]{0}', space=sflag, size = 0x4, scoped, tag = 'scoped memory for tpu_custom_call.1']
    #allocation10 [shape = 'u8[8192]{0}', space=vmem, size = 0x2000, scoped, tag = 'output window, operand 0']
    %9 = vsyncpa [#allocation3], 0
    %s10 = scalar_lea.sflag [#allocation3], 1
    %11 = vsyncpa %s10, 0
    %12 = vsyncpa [#allocation6], 0
    %13 = vsyncpa [#allocation9], 0
    %14 = vsyncpa [#allocation4], 0
    %s15 = scalar_lea.sflag [#allocation4], 1
    %16 = vsyncpa %s15, 0
    loop: start=0, step=1, limit=4
    $region2: #{tpu_custom_call.1} parent=1 // loop_pre_header
      _
    $region3: #{tpu_custom_call.1} parent=1 // loop_header
      %s18 = sphi 0, %s22
      %p19 = scmp.ge.s32.totalorder %s18, 4
      %s28 = sphi 0, %s30
      %s31 = sphi 0, %s28
      %s32 = sphi 0, %s31
      %s48 = sphi 0, %s32
      %s52 = sphi 0, %s52
      %s54 = sphi 0, %s52
      %s55 = sphi 0, %s54
      %s69 = sphi 0, %s55
      %s73 = sphi 0, %s73
      %s75 = sphi 0, %s73
      %s76 = sphi 0, %s75
      %s90 = sphi 0, %s76
      %s94 = sphi 0, %s94
      %s96 = sphi 0, %s94
      %s97 = sphi 0, %s96
      %s111 = sphi 0, %s97
      %s117 = sphi 0, %s119
      %s120 = sphi 0, %s117
      %s121 = sphi 0, %s120
      %s137 = sphi 0, %s121
    $region4: #{tpu_custom_call.1} parent=1 // loop_header_branch
      %21 = sbr.rel (%p19) target = $region8
    $region5: #{tpu_custom_call.1} parent=1 // loop_body
      %s23 = ssub.s32 %s18, 1
      %s24 = ssub.s32 %s18, 2
      %s25 = sadd.s32 %s18, 1
      %s26 = ssub.s32 %s18, %s25
      %p27 = scmp.eq.s32.totalorder %s26, 0
      %s29 = sadd.s32 %s28, 1
      %s30 = scalar_select %p27, %s28, %s29
      %p33 = pneg %p27
      %p34 = scmp.eq.s32.totalorder %s18, 1
      %p35 = por %p33, %p34
      %p36 = scmp.ne.s32.totalorder %s28, %s31
      %p37 = scmp.eq.s32.totalorder %s18, 0
      %p38 = por %p36, %p37
      %p39 = scmp.ne.s32.totalorder %s28, %s31
      %p40 = scmp.eq.s32.totalorder %s23, 1
      %p41 = por %p39, %p40
      %p42 = scmp.ne.s32.totalorder %s31, %s32
      %p43 = scmp.eq.s32.totalorder %s23, 0
      %p44 = por %p42, %p43
      %p45 = scmp.ne.s32.totalorder %s31, %s32
      %p46 = scmp.eq.s32.totalorder %s24, 1
      %p47 = por %p45, %p46
      %p49 = scmp.ne.s32.totalorder %s32, %s48
      %p50 = scmp.eq.s32.totalorder %s24, 0
      %p51 = por %p49, %p50
      %s53 = sadd.s32 %s52, 1
      %p56 = scmp.eq.s32.totalorder %s18, 1
      %p57 = scmp.ne.s32.totalorder %s52, %s54
      %p58 = scmp.eq.s32.totalorder %s18, 0
      %p59 = por %p57, %p58
      %p60 = scmp.ne.s32.totalorder %s52, %s54
      %p61 = scmp.eq.s32.totalorder %s23, 1
      %p62 = por %p60, %p61
      %p63 = scmp.ne.s32.totalorder %s54, %s55
      %p64 = scmp.eq.s32.totalorder %s23, 0
      %p65 = por %p63, %p64
      %p66 = scmp.ne.s32.totalorder %s54, %s55
      %p67 = scmp.eq.s32.totalorder %s24, 1
      %p68 = por %p66, %p67
      %p70 = scmp.ne.s32.totalorder %s55, %s69
      %p71 = scmp.eq.s32.totalorder %s24, 0
      %p72 = por %p70, %p71
      %s74 = sadd.s32 %s73, 1
      %p77 = scmp.eq.s32.totalorder %s18, 1
      %p78 = scmp.ne.s32.totalorder %s73, %s75
      %p79 = scmp.eq.s32.totalorder %s18, 0
      %p80 = por %p78, %p79
      %p81 = scmp.ne.s32.totalorder %s73, %s75
      %p82 = scmp.eq.s32.totalorder %s23, 1
      %p83 = por %p81, %p82
      %p84 = scmp.ne.s32.totalorder %s75, %s76
      %p85 = scmp.eq.s32.totalorder %s23, 0
      %p86 = por %p84, %p85
      %p87 = scmp.ne.s32.totalorder %s75, %s76
      %p88 = scmp.eq.s32.totalorder %s24, 1
      %p89 = por %p87, %p88
      %p91 = scmp.ne.s32.totalorder %s76, %s90
      %p92 = scmp.eq.s32.totalorder %s24, 0
      %p93 = por %p91, %p92
      %s95 = sadd.s32 %s94, 1
      %p98 = scmp.eq.s32.totalorder %s18, 1
      %p99 = scmp.ne.s32.totalorder %s94, %s96
      %p100 = scmp.eq.s32.totalorder %s18, 0
      %p101 = por %p99, %p100
      %p102 = scmp.ne.s32.totalorder %s94, %s96
      %p103 = scmp.eq.s32.totalorder %s23, 1
      %p104 = por %p102, %p103
      %p105 = scmp.ne.s32.totalorder %s96, %s97
      %p106 = scmp.eq.s32.totalorder %s23, 0
      %p107 = por %p105, %p106
      %p108 = scmp.ne.s32.totalorder %s96, %s97
      %p109 = scmp.eq.s32.totalorder %s24, 1
      %p110 = por %p108, %p109
      %p112 = scmp.ne.s32.totalorder %s97, %s111
      %p113 = scmp.eq.s32.totalorder %s24, 0
      %p114 = por %p112, %p113
      %s115 = ssub.s32 %s18, %s25
      %p116 = scmp.eq.s32.totalorder %s115, 0
      %s118 = sadd.s32 %s117, 1
      %s119 = scalar_select %p116, %s117, %s118
      %p122 = pneg %p116
      %p123 = scmp.eq.s32.totalorder %s18, 1
      %p124 = por %p122, %p123
      %p125 = scmp.ne.s32.totalorder %s117, %s120
      %p126 = scmp.eq.s32.totalorder %s18, 0
      %p127 = por %p125, %p126
      %p128 = scmp.ne.s32.totalorder %s117, %s120
      %p129 = scmp.eq.s32.totalorder %s23, 1
      %p130 = por %p128, %p129
      %p131 = scmp.ne.s32.totalorder %s120, %s121
      %p132 = scmp.eq.s32.totalorder %s23, 0
      %p133 = por %p131, %p132
      %p134 = scmp.ne.s32.totalorder %s120, %s121
      %p135 = scmp.eq.s32.totalorder %s24, 1
      %p136 = por %p134, %p135
      %p138 = scmp.ne.s32.totalorder %s121, %s137
      %p139 = scmp.eq.s32.totalorder %s24, 0
      %p140 = por %p138, %p139
      %p141 = scmp.le.s32.totalorder 1, %s18
      %p142 = scmp.lt.s32.totalorder %s18, 3
      %p143 = pnand %p141, %p142
      %p144 = pneg %p143
      // Predicated region
      $region9: #{tpu_custom_call.1} parent=5 // pred_check
        _
      $region10: #{tpu_custom_call.1} parent=5 // pred_check_branch
        %146 = sbr.rel (%p143) target = $region12
      $region11: #{tpu_custom_call.1} parent=5 // pred_region
        %s147 = ssub.s32 %s18, 1
        // Predicated region
        $region13: #{tpu_custom_call.1} parent=11 // pred_check
          %p148 = pneg %p65
        $region14: #{tpu_custom_call.1} parent=11 // pred_check_branch
          %150 = sbr.rel (%p148) target = $region16
        $region15: #{tpu_custom_call.1} parent=11 // pred_region
          %s152 = ssub.s32 128, 128
          %153 = vsyncadd [#allocation6], %s152
          %s155 = sshll.u32 [#allocation5], 4
          %s156 = int_to_ptr.vmem [resolvable:$true] %s155
          %158 = dma.hbm_to_vmem [thread:$0]  %s1, 128, %s156, [#allocation6]
        $region16: #{tpu_custom_call.1} parent=11 // pred_fallthru
          _
        // Predicated region
        $region17: #{tpu_custom_call.1} parent=11 // pred_check
          %p159 = pneg %p86
        $region18: #{tpu_custom_call.1} parent=11 // pred_check_branch
          %161 = sbr.rel (%p159) target = $region20
        $region19: #{tpu_custom_call.1} parent=11 // pred_region
          %s163 = ssub.s32 128, 128
          %164 = vsyncadd [#allocation6], %s163
          %s166 = sshll.u32 [#allocation7], 4
          %s167 = int_to_ptr.vmem [resolvable:$true] %s166
          %169 = dma.hbm_to_vmem [thread:$0]  %s2, 128, %s167, [#allocation6]
        $region20: #{tpu_custom_call.1} parent=11 // pred_fallthru
          _
        // Predicated region
        $region21: #{tpu_custom_call.1} parent=11 // pred_check
          %p170 = pneg %p107
        $region22: #{tpu_custom_call.1} parent=11 // pred_check_branch
          %172 = sbr.rel (%p170) target = $region24
        $region23: #{tpu_custom_call.1} parent=11 // pred_region
          %s174 = ssub.s32 128, 128
          %175 = vsyncadd [#allocation9], %s174
          %s177 = sshll.u32 [#allocation8], 4
          %s178 = int_to_ptr.vmem [resolvable:$true] %s177
          %180 = dma.hbm_to_vmem [thread:$0]  %s3, 128, %s178, [#allocation9]
        $region24: #{tpu_custom_call.1} parent=11 // pred_fallthru
          _
      $region12: #{tpu_custom_call.1} parent=5 // pred_fallthru
        _
      %p181 = scmp.lt.s32.totalorder %s18, 2
      // Predicated region
      $region25: #{tpu_custom_call.1} parent=5 // pred_check
        %p182 = pneg %p181
      $region26: #{tpu_custom_call.1} parent=5 // pred_check_branch
        %184 = sbr.rel (%p182) target = $region28
      $region27: #{tpu_custom_call.1} parent=5 // pred_region
        // Predicated region
        $region29: #{tpu_custom_call.1} parent=27 // pred_check
          %p185 = pneg %p38
        $region30: #{tpu_custom_call.1} parent=27 // pred_check_branch
          %187 = sbr.rel (%p185) target = $region32
        $region31: #{tpu_custom_call.1} parent=27 // pred_region
          %s188 = sand.u32 %s28, 1
          %s189 = scalar_lea.sflag [#allocation3], %s188
          %s190 = sand.u32 %s28, 1
          %s191 = smul.addr %s190, 8
          %s192 = scalar_lea.vmem [#allocation2], %s191
          %s194 = ssub.s32 128, 128
          %195 = vsyncadd %s189, %s194
          %s196 = smul.addr %s18, 128
          %s197 = scalar_lea.hbm %s0, %s196
          %s199 = sshll.u32 %s192, 4
          %s200 = int_to_ptr.vmem [resolvable:$true] %s199
          %202 = dma.hbm_to_vmem [thread:$0]  %s197, 128, %s200, %s189
        $region32: #{tpu_custom_call.1} parent=27 // pred_fallthru
          _
      $region28: #{tpu_custom_call.1} parent=5 // pred_fallthru
        _
      %p203 = scmp.le.s32.totalorder 1, %s18
      %p204 = scmp.lt.s32.totalorder %s18, 3
      %p205 = pnand %p203, %p204
      %p206 = pneg %p205
      // Predicated region
      $region33: #{tpu_custom_call.1} parent=5 // pred_check
        _
      $region34: #{tpu_custom_call.1} parent=5 // pred_check_branch
        %208 = sbr.rel (%p205) target = $region36
      $region35: #{tpu_custom_call.1} parent=5 // pred_region
        %s209 = ssub.s32 %s18, 1
        %s210 = sand.u32 %s31, 1
        %s211 = scalar_lea.sflag [#allocation3], %s210
        %s212 = sand.u32 %s31, 1
        %s213 = smul.addr %s212, 8
        %s214 = scalar_lea.vmem [#allocation2], %s213
        // Predicated region
        $region37: #{tpu_custom_call.1} parent=35 // pred_check
          %p215 = pneg %p44
        $region38: #{tpu_custom_call.1} parent=35 // pred_check_branch
          %217 = sbr.rel (%p215) target = $region40
        $region39: #{tpu_custom_call.1} parent=35 // pred_region
          %218 = dma.done %s211, 128
        $region40: #{tpu_custom_call.1} parent=35 // pred_fallthru
          _
        // Predicated region
        $region41: #{tpu_custom_call.1} parent=35 // pred_check
          %p219 = pneg %p65
        $region42: #{tpu_custom_call.1} parent=35 // pred_check_branch
          %221 = sbr.rel (%p219) target = $region44
        $region43: #{tpu_custom_call.1} parent=35 // pred_region
          %222 = dma.done [#allocation6], 128
        $region44: #{tpu_custom_call.1} parent=35 // pred_fallthru
          _
        // Predicated region
        $region45: #{tpu_custom_call.1} parent=35 // pred_check
          %p223 = pneg %p86
        $region46: #{tpu_custom_call.1} parent=35 // pred_check_branch
          %225 = sbr.rel (%p223) target = $region48
        $region47: #{tpu_custom_call.1} parent=35 // pred_region
          %226 = dma.done [#allocation6], 128
        $region48: #{tpu_custom_call.1} parent=35 // pred_fallthru
          _
        // Predicated region
        $region49: #{tpu_custom_call.1} parent=35 // pred_check
          %p227 = pneg %p107
        $region50: #{tpu_custom_call.1} parent=35 // pred_check_branch
          %229 = sbr.rel (%p227) target = $region52
        $region51: #{tpu_custom_call.1} parent=35 // pred_region
          %230 = dma.done [#allocation9], 128
        $region52: #{tpu_custom_call.1} parent=35 // pred_fallthru
          _
        %s231 = sand.u32 %s31, 1
        %s232 = scalar_lea.sflag [#allocation3], %s231
        %s233 = sand.u32 %s31, 1
        %s234 = smul.addr %s233, 8
        %s235 = scalar_lea.vmem [#allocation2], %s234
        %p236 = pneg %p44
        %p237 = pneg %p41
        %p238 = pneg %p65
        %p239 = pneg %p62
        %p240 = pneg %p86
        %p241 = pneg %p83
        %p242 = pneg %p107
        %p243 = pneg %p104
        %p244 = pneg %p133
        %p245 = pneg %p130
        %s246 = sand.u32 %s120, 1
        %s247 = scalar_lea.sflag [#allocation4], %s246
        %s248 = sand.u32 %s120, 1
        %s249 = smul.addr %s248, 8
        %s250 = scalar_lea.vmem [#allocation10], %s249
        %v251 = vld [vmem:[%s214] sm:$0xff]
        %v252 = vld [vmem:[#allocation8] sm:$0xff]
        %254 = vset.pattern.permute.xlu0 0
        %255 = vperm.xlu0 %254, %v252
        %v256 = vpop.permute.xlu0 %255
        %v258 = vmul.f32 %v251, %v256
        %259 = vset.pattern.permute.xlu0 3
        %260 = vperm.xlu0 %259, %v252
        %v261 = vpop.permute.xlu0 %260
        %v263 = vadd.f32 %v258, %v261
        %264 = vset.pattern.permute.xlu0 1
        %265 = vperm.xlu0 %264, %v252
        %v266 = vpop.permute.xlu0 %265
        %v268 = vmul.f32 %v251, %v266
        %270 = vrot.lane.b32.xlu0 %v268, 126
        %v271 = vpop.permute.xlu0 %270
        %v273 = vadd.f32 %v263, %v271
        %274 = vset.pattern.permute.xlu0 2
        %275 = vperm.xlu0 %274, %v252
        %v276 = vpop.permute.xlu0 %275
        %v278 = vmul.f32 %v251, %v276
        %280 = vrot.lane.b32.xlu0 %v278, 124
        %v281 = vpop.permute.xlu0 %280
        %v283 = vadd.f32 %v273, %v281
        %v284 = vld [vmem:[#allocation5] sm:$0xff]
        %285 = vset.pattern.permute.xlu0 4
        %286 = vperm.xlu0 %285, %v252
        %v287 = vpop.permute.xlu0 %286
        %vm289 = vcmask 64512
        %v291 = vsel %vm289, %v284, 0
        %293 = vmatprep.subr.mxu0 0.0
        %294 = vmatpush1.msra.mxu0 0.0
        %295 = vmatprep.subr.mxu0 0.0
        %296 = vmatpush1.msra.mxu0 0.0
        %297 = vmatprep.subr.mxu0 0.0
        %298 = vmatpush1.msra.mxu0 0.0
        %299 = vmatprep.subr.mxu0 0.0
        %300 = vmatpush1.msra.mxu0 0.0
        %301 = vmatprep.subr.mxu0 0.0
        %302 = vmatpush1.msra.mxu0 0.0
        %303 = vmatprep.subr.mxu0 0.0
        %304 = vmatpush1.msra.mxu0 0.0
        %305 = vmatprep.subr.mxu0 0.0
        %306 = vmatpush1.msra.mxu0 0.0
        %307 = vmatprep.subr.mxu0 0.0
        %308 = vmatpush1.msra.mxu0 0.0
        %309 = vmatprep.subr.mxu0 0.0
        %310 = vmatpush1.msra.mxu0 0.0
        %311 = vmatprep.subr.mxu0 0.0
        %312 = vmatpush1.msra.mxu0 0.0
        %313 = vmatprep.subr.mxu0 0.0
        %314 = vmatpush1.msra.mxu0 0.0
        %315 = vmatprep.subr.mxu0 0.0
        %316 = vmatpush1.msra.mxu0 0.0
        %317 = vmatprep.subr.mxu0 0.0
        %318 = vmatpush1.msra.mxu0 0.0
        %319 = vmatprep.subr.mxu0 0.0
        %320 = vmatpush1.msra.mxu0 0.0
        %321 = vmatprep.subr.mxu0 0.0
        %322 = vmatpush1.msra.mxu0 0.0
        %323 = vmatprep.subr.mxu0 0.0
        %324 = vmatpush1.msra.mxu0 %v283
        %325 = vmatprep.subr.mxu0 0.0
        %326 = vmatpush2.msra.mxu0 0.0
        %327 = vmatprep.subr.mxu0 0.0
        %328 = vmatpush2.msra.mxu0 0.0
        %329 = vmatprep.subr.mxu0 0.0
        %330 = vmatpush2.msra.mxu0 0.0
        %331 = vmatprep.subr.mxu0 0.0
        %332 = vmatpush2.msra.mxu0 0.0
        %333 = vmatprep.subr.mxu0 0.0
        %334 = vmatpush2.msra.mxu0 0.0
        %335 = vmatprep.subr.mxu0 0.0
        %336 = vmatpush2.msra.mxu0 0.0
        %337 = vmatprep.subr.mxu0 0.0
        %338 = vmatpush2.msra.mxu0 0.0
        %339 = vmatprep.subr.mxu0 0.0
        %340 = vmatpush2.msra.mxu0 0.0
        %341 = vmatprep.subr.mxu0 0.0
        %342 = vmatpush2.msra.mxu0 0.0
        %343 = vmatprep.subr.mxu0 0.0
        %344 = vmatpush2.msra.mxu0 0.0
        %345 = vmatprep.subr.mxu0 0.0
        %346 = vmatpush2.msra.mxu0 0.0
        %347 = vmatprep.subr.mxu0 0.0
        %348 = vmatpush2.msra.mxu0 0.0
        %349 = vmatprep.subr.mxu0 0.0
        %350 = vmatpush2.msra.mxu0 0.0
        %351 = vmatprep.subr.mxu0 0.0
        %352 = vmatpush2.msra.mxu0 0.0
        %353 = vmatprep.subr.mxu0 0.0
        %354 = vmatpush2.msra.mxu0 0.0
        %355 = vmatprep.subr.mxu0 0.0
        %356 = vmatpush2.msra.mxu0 0.0
        %357 = vmatprep.mubr.f32.mxu0 0.0
        %358 = vmatmul.mubr.f32.gmra.mxu0 %v291
        %v359 = vpop.f32.mrf.mxu0
        %v360 = vadd.f32 %v287, %v359
        %v361 = vpop.f32.mrf.mxu0
        %362 = vdwg.mxu0
        %v363 = vmax.f32 %v360, 0.0
        %v364 = vld [vmem:[#allocation7] sm:$0xff]
        %365 = vset.pattern.permute.xlu0 5
        %366 = vperm.xlu0 %365, %v252
        %v367 = vpop.permute.xlu0 %366
        %v370 = vsel %vm289, %v364, 0
        %372 = vmatprep.subr.mxu0 0.0
        %373 = vmatpush1.msra.mxu0 0.0
        %374 = vmatprep.subr.mxu0 0.0
        %375 = vmatpush1.msra.mxu0 0.0
        %376 = vmatprep.subr.mxu0 0.0
        %377 = vmatpush1.msra.mxu0 0.0
        %378 = vmatprep.subr.mxu0 0.0
        %379 = vmatpush1.msra.mxu0 0.0
        %380 = vmatprep.subr.mxu0 0.0
        %381 = vmatpush1.msra.mxu0 0.0
        %382 = vmatprep.subr.mxu0 0.0
        %383 = vmatpush1.msra.mxu0 0.0
        %384 = vmatprep.subr.mxu0 0.0
        %385 = vmatpush1.msra.mxu0 0.0
        %386 = vmatprep.subr.mxu0 0.0
        %387 = vmatpush1.msra.mxu0 0.0
        %388 = vmatprep.subr.mxu0 0.0
        %389 = vmatpush1.msra.mxu0 0.0
        %390 = vmatprep.subr.mxu0 0.0
        %391 = vmatpush1.msra.mxu0 0.0
        %392 = vmatprep.subr.mxu0 0.0
        %393 = vmatpush1.msra.mxu0 0.0
        %394 = vmatprep.subr.mxu0 0.0
        %395 = vmatpush1.msra.mxu0 0.0
        %396 = vmatprep.subr.mxu0 0.0
        %397 = vmatpush1.msra.mxu0 0.0
        %398 = vmatprep.subr.mxu0 0.0
        %399 = vmatpush1.msra.mxu0 0.0
        %400 = vmatprep.subr.mxu0 0.0
        %401 = vmatpush1.msra.mxu0 0.0
        %402 = vmatprep.subr.mxu0 0.0
        %403 = vmatpush1.msra.mxu0 %v363
        %404 = vmatprep.subr.mxu0 0.0
        %405 = vmatpush2.msra.mxu0 0.0
        %406 = vmatprep.subr.mxu0 0.0
        %407 = vmatpush2.msra.mxu0 0.0
        %408 = vmatprep.subr.mxu0 0.0
        %409 = vmatpush2.msra.mxu0 0.0
        %410 = vmatprep.subr.mxu0 0.0
        %411 = vmatpush2.msra.mxu0 0.0
        %412 = vmatprep.subr.mxu0 0.0
        %413 = vmatpush2.msra.mxu0 0.0
        %414 = vmatprep.subr.mxu0 0.0
        %415 = vmatpush2.msra.mxu0 0.0
        %416 = vmatprep.subr.mxu0 0.0
        %417 = vmatpush2.msra.mxu0 0.0
        %418 = vmatprep.subr.mxu0 0.0
        %419 = vmatpush2.msra.mxu0 0.0
        %420 = vmatprep.subr.mxu0 0.0
        %421 = vmatpush2.msra.mxu0 0.0
        %422 = vmatprep.subr.mxu0 0.0
        %423 = vmatpush2.msra.mxu0 0.0
        %424 = vmatprep.subr.mxu0 0.0
        %425 = vmatpush2.msra.mxu0 0.0
        %426 = vmatprep.subr.mxu0 0.0
        %427 = vmatpush2.msra.mxu0 0.0
        %428 = vmatprep.subr.mxu0 0.0
        %429 = vmatpush2.msra.mxu0 0.0
        %430 = vmatprep.subr.mxu0 0.0
        %431 = vmatpush2.msra.mxu0 0.0
        %432 = vmatprep.subr.mxu0 0.0
        %433 = vmatpush2.msra.mxu0 0.0
        %434 = vmatprep.subr.mxu0 0.0
        %435 = vmatpush2.msra.mxu0 0.0
        %436 = vmatprep.mubr.f32.mxu0 0.0
        %437 = vmatmul.mubr.f32.gmra.mxu0 %v370
        %v438 = vpop.f32.mrf.mxu0
        %v439 = vadd.f32 %v367, %v438
        %v440 = vpop.f32.mrf.mxu0
        %441 = vdwg.mxu0
        %443 = vrot.lane.b32.xlu0 %v251, 124
        %v444 = vpop.permute.xlu0 %443
        %v446 = vadd.f32 %v439, %v444
        %v447 = vmax.f32 %v446, 0.0
        %vm448 = vcmask 228352
        %449 = vst.msk [vmem:[%s250] sm:$0xff] %vm448, %v447
        %s450 = sand.u32 %s120, 1
        %s451 = scalar_lea.sflag [#allocation4], %s450
        %s452 = sand.u32 %s120, 1
        %s453 = smul.addr %s452, 8
        %s454 = scalar_lea.vmem [#allocation10], %s453
        // Predicated region
        $region53: #{tpu_custom_call.1} parent=35 // pred_check
          %p455 = pneg %p130
        $region54: #{tpu_custom_call.1} parent=35 // pred_check_branch
          %457 = sbr.rel (%p455) target = $region56
        $region55: #{tpu_custom_call.1} parent=35 // pred_region
          %s459 = ssub.s32 128, 128
          %460 = vsyncadd %s451, %s459
          %s461 = smul.addr %s23, 128
          %s462 = scalar_lea.hbm %s4, %s461
          %s464 = sshll.u32 %s454, 4
          %s465 = int_to_ptr.vmem [resolvable:$true] %s464
          %467 = dma.vmem_to_hbm [thread:$0]  %s465, 128, %s462, %s451
        $region56: #{tpu_custom_call.1} parent=35 // pred_fallthru
          _
      $region36: #{tpu_custom_call.1} parent=5 // pred_fallthru
        _
      %p468 = scmp.le.s32.totalorder 2, %s18
      // Predicated region
      $region57: #{tpu_custom_call.1} parent=5 // pred_check
        %p469 = pneg %p468
      $region58: #{tpu_custom_call.1} parent=5 // pred_check_branch
        %471 = sbr.rel (%p469) target = $region60
      $region59: #{tpu_custom_call.1} parent=5 // pred_region
        %s472 = ssub.s32 %s18, 2
        // Predicated region
        $region61: #{tpu_custom_call.1} parent=59 // pred_check
          %p473 = pneg %p136
        $region62: #{tpu_custom_call.1} parent=59 // pred_check_branch
          %475 = sbr.rel (%p473) target = $region64
        $region63: #{tpu_custom_call.1} parent=59 // pred_region
          %s476 = sand.u32 %s121, 1
          %s477 = scalar_lea.sflag [#allocation4], %s476
          %s478 = sand.u32 %s121, 1
          %s479 = smul.addr %s478, 8
          %s480 = scalar_lea.vmem [#allocation10], %s479
          %481 = dma.done %s477, 128
        $region64: #{tpu_custom_call.1} parent=59 // pred_fallthru
          _
      $region60: #{tpu_custom_call.1} parent=5 // pred_fallthru
        _
    $region6: #{tpu_custom_call.1} parent=1 // loop_footer
      %s22 = sadd.s32 1, %s18
    $region7: #{tpu_custom_call.1} parent=1 // loop_footer_branch
      %17 = sbr.rel target = $region3
    $region8: #{tpu_custom_call.1} parent=1 // loop_exit
      _
    %482 = vsyncpa [#allocation3], 1
    %s483 = scalar_lea.sflag [#allocation3], 1
    %484 = vsyncpa %s483, 1
    %485 = vsyncpa [#allocation6], 1
    %486 = vsyncpa [#allocation9], 1
    %487 = vsyncpa [#allocation4], 1
    %s488 = scalar_lea.sflag [#allocation4], 1
    %489 = vsyncpa %s488, 1

</llo_original>
